<compile_context>
chip_gen: v7x
topology: tpu7x:2x2x1
jax: 0.10.0
libtpu: 0.0.40
codegen_flags: <defaults>
</compile_context>

<pallas_src>
import functools

import jax
import jax.numpy as jnp
from jax.experimental import pallas as pl
from jax.experimental.pallas import tpu as pltpu

_LANE = 128
_SUBLANE = 8


def _round_up(x, m):
    return ((x + m - 1) // m) * m


def _device_kind():
    try:
        return jax.devices()[0].device_kind.lower()
    except Exception:
        return ""


# ----------------------------------------------------------------------------
# Pallas kernel: fused 2-layer MLP  (Linear -> tanh -> Linear -> tanh)
# ----------------------------------------------------------------------------
def _obfuscator_mlp_kernel(x_ref, w1_ref, b1_ref, w2_ref, b2_ref, o_ref, *, bf16_tanh):
    # x arrives in its original dtype; weights are pre-cast bf16 MXU operands,
    # accumulation and bias adds stay f32.
    xb = x_ref[...].astype(jnp.bfloat16)                                  # (TB, D)
    h = jnp.dot(xb, w1_ref[...], preferred_element_type=jnp.float32)     # (TB, Pp) on MXU
    h = h + b1_ref[...]                                                   # f32 bias add
    if bf16_tanh:
        # v6e/v7x: bf16 EUP path; the value was headed for a bf16 MXU operand anyway.
        h_act = jnp.tanh(h.astype(jnp.bfloat16))
    else:
        # v5e has no bf16 EUP/VPU: keep the f32 transcendental, cast after.
        h_act = jnp.tanh(h).astype(jnp.bfloat16)
    y = jnp.dot(h_act, w2_ref[...], preferred_element_type=jnp.float32)  # (TB, P) on MXU
    o_ref[...] = jnp.tanh(y + b2_ref[...]).astype(o_ref.dtype)           # un-padded store


# ----------------------------------------------------------------------------
# Tiling / VMEM planning
# ----------------------------------------------------------------------------
def _vmem_budget_bytes(kind):
    if "v6" in kind:
        return 24 << 20            # 128 MiB physical: big tiles amortize grid overhead
    if "v5e" in kind or "v5 lite" in kind or "v5lite" in kind:
        return 12 << 20            # v5e: stay close to the 16 MiB scoped default
    return 16 << 20                # v7x (64 MiB physical per TC) / v5p / unknown


def _plan_tiles(B, D, P, Pp, x_itemsize, out_itemsize, kind):
    """Pick the batch tile and a matching explicit VMEM limit (honest accounting)."""
    weight_bytes = 2 * D * Pp + 4 * Pp + 2 * Pp * P + 4 * P   # bf16 w1/w2, f32 b1/b2
    per_row = (2 * x_itemsize * D        # x tile, double buffered
               + 2 * out_itemsize * P    # out tile, double buffered
               + 2 * D                   # bf16 copy of x
               + 6 * Pp                  # f32 + bf16 hidden
               + 8 * P)                  # f32 y and tanh(y)
    budget = _vmem_budget_bytes(kind)
    tb = max(_SUBLANE,
             (max(budget - weight_bytes, per_row * _SUBLANE) // per_row)
             // _SUBLANE * _SUBLANE)
    tb = min(tb, 4096)                                   # amortizes ~0.35 us/step overhead
    # Prefer >=4 grid steps when tiles stay >=512 rows: lets "parallel" shard across
    # v7x's two TensorCores and keeps DMA/compute overlap on every generation.
    quarter = _round_up(pl.cdiv(B, 4), _SUBLANE)
    if quarter >= 512:
        tb = min(tb, quarter)
    tb = min(tb, _round_up(B, _SUBLANE))                 # don't exceed (padded) batch
    # Explicit scoped-VMEM limit sized to the real footprint (assume the double-buffered
    # weight fallback), with headroom for compiler-internal scratch.
    footprint = 2 * weight_bytes + tb * per_row
    vmem_limit = int(min(64 << 20, max(32 << 20, footprint + (4 << 20))))
    return tb, vmem_limit


# Cache whether this jax build accepts pipeline_mode=pl.Buffered(1).
_SINGLE_BUFFER_WEIGHTS = [hasattr(pl, "Buffered")]


# ----------------------------------------------------------------------------
# Wrapper
# ----------------------------------------------------------------------------
def obfuscator_forward(cent_obs, params, predict_dim, out_dtype=jnp.float32):
    """Forward pass of Obfuscator.

    cent_obs: (batch, obs_dim), any float dtype (cast inside the kernel, mirroring
              `check(cent_obs).to(dtype=float32)`).
    params:   dict with w1 (D,P), b1 (1,P), w2 (P,P), b2 (1,P); used iff predict_dim > 0.
    out_dtype: float32 (default, matches the module) or bfloat16 as an opt-in
               precision/bandwidth trade-off.
    """
    if not predict_dim:
        return cent_obs.astype(jnp.float32)   # identity branch (args.predict_dim falsy)

    B, D = cent_obs.shape
    P = int(predict_dim)

    # Pad only the HIDDEN dim (w1 output / w2 input) to a lane-dense 128 multiple.
    # Zero padding is exact: tanh(0)=0 hidden columns meet zero rows of w2.
    # The kernel output stays (B, P) -- no padded writeback, no wrapper slice.
    Pp = _round_up(P, _LANE)
    w1 = params["w1"].astype(jnp.float32)
    b1 = params["b1"].reshape(1, P).astype(jnp.float32)
    w2 = params["w2"].astype(jnp.float32)
    b2 = params["b2"].reshape(1, P).astype(jnp.float32)
    if Pp != P:
        w1 = jnp.pad(w1, ((0, 0), (0, Pp - P)))       # zero pad (exactness relies on this)
        b1 = jnp.pad(b1, ((0, 0), (0, Pp - P)))
        w2 = jnp.pad(w2, ((0, Pp - P), (0, 0)))
    # Pre-cast MXU operands once (halves weight DMA bytes, removes per-step VPU cast).
    w1 = w1.astype(jnp.bfloat16)
    w2 = w2.astype(jnp.bfloat16)

    kind = _device_kind()
    bf16_tanh = ("v6" in kind) or ("v7" in kind)      # v5e & older: f32 EUP only
    out_itemsize = jnp.dtype(out_dtype).itemsize
    TB, vmem_limit = _plan_tiles(B, D, P, Pp, cent_obs.dtype.itemsize, out_itemsize, kind)
    grid = (pl.cdiv(B, TB),)   # partial final tile: padded reads, masked writes

    cost = pl.CostEstimate(
        flops=2 * B * (D * Pp + Pp * P),
        transcendentals=B * (Pp + P),
        bytes_accessed=(B * D * cent_obs.dtype.itemsize
                        + 2 * D * Pp + 4 * Pp + 2 * Pp * P + 4 * P
                        + B * P * out_itemsize),
    )

    kernel = functools.partial(_obfuscator_mlp_kernel, bf16_tanh=bf16_tanh)

    def run(single_buffer_weights):
        w_kwargs = {}
        if single_buffer_weights:
            # Constant index_map -> operand is resident; one buffer is enough,
            # freeing VMEM for larger batch tiles.
            w_kwargs["pipeline_mode"] = pl.Buffered(1)
        return pl.pallas_call(
            kernel,
            out_shape=jax.ShapeDtypeStruct((B, P), out_dtype),
            grid=grid,
            in_specs=[
                pl.BlockSpec((TB, D), lambda i: (i, 0)),              # batch-tiled activations
                pl.BlockSpec((D, Pp), lambda i: (0, 0), **w_kwargs),  # resident bf16 w1
                pl.BlockSpec((1, Pp), lambda i: (0, 0), **w_kwargs),  # resident f32 b1
                pl.BlockSpec((Pp, P), lambda i: (0, 0), **w_kwargs),  # resident bf16 w2
                pl.BlockSpec((1, P), lambda i: (0, 0), **w_kwargs),   # resident f32 b2
            ],
            out_specs=pl.BlockSpec((TB, P), lambda i: (i, 0)),        # un-padded output
            compiler_params=pltpu.CompilerParams(
                dimension_semantics=("parallel",),   # independent batch tiles (v7x megacore)
                vmem_limit_bytes=vmem_limit,
            ),
            cost_estimate=cost,
        )(cent_obs, w1, b1, w2, b2)

    if _SINGLE_BUFFER_WEIGHTS[0]:
        try:
            return run(True)
        except Exception:
            # This jax build rejected pipeline_mode=Buffered(1); remember and fall back
            # to default (double-buffered) resident weights. Real errors re-raise below.
            _SINGLE_BUFFER_WEIGHTS[0] = False
    return run(False)


# ----------------------------------------------------------------------------
# Deterministic parameter init (orthogonal, gain=args.gain; zero biases)
# ----------------------------------------------------------------------------
def init_obfuscator_params(key, obs_dim, predict_dim, gain=0.01):
    k1, k2 = jax.random.split(key)
    ortho = jax.nn.initializers.orthogonal(scale=gain)
    return {
        "w1": ortho(k1, (obs_dim, predict_dim), jnp.float32),
        "b1": jnp.zeros((1, predict_dim), jnp.float32),
        "w2": ortho(k2, (predict_dim, predict_dim), jnp.float32),
        "b2": jnp.zeros((1, predict_dim), jnp.float32),
    }


def _reference(x, params):
    x = x.astype(jnp.float32)
    h = jnp.tanh(x @ params["w1"] + params["b1"])
    return jnp.tanh(h @ params["w2"] + params["b2"])


if __name__ == "__main__":
    batch = 8          # number of (agent, env) rollout rows
    obs_dim = 32       # cent_obs_shape[0]
    predict_dim = 16   # args.predict_dim (nonzero -> MLP branch)
    gain = 0.01        # args.gain

    key = jax.random.PRNGKey(0)
    k_x, k_p, k_x2 = jax.random.split(key, 3)
    cent_obs = jax.random.normal(k_x, (batch, obs_dim), dtype=jnp.float32)
    params = init_obfuscator_params(k_p, obs_dim, predict_dim, gain=gain)

    out = jax.block_until_ready(obfuscator_forward(cent_obs, params, predict_dim))
    ref = _reference(cent_obs, params)
    assert out.shape == (batch, predict_dim)
    assert jnp.allclose(out, ref, atol=1e-3, rtol=1e-2), "mismatch vs reference"

    # Batch that is NOT a multiple of the sublane/tile size (masked final tile).
    cent_obs2 = jax.random.normal(k_x2, (11, obs_dim), dtype=jnp.float32)
    out2 = jax.block_until_ready(obfuscator_forward(cent_obs2, params, predict_dim))
    assert out2.shape == (11, predict_dim)
    assert jnp.allclose(out2, _reference(cent_obs2, params), atol=1e-3, rtol=1e-2)

    # Identity branch (args.predict_dim falsy).
    ident = jax.block_until_ready(obfuscator_forward(cent_obs, params, 0))
    assert jnp.allclose(ident, cent_obs)

    print("KERNEL_OK")
</pallas_src>

<mosaic_0001>
module attributes {stable_mosaic.version = 11 : i64} {
  func.func @_obfuscator_mlp_kernel(%arg0: i32, %arg1: memref<8x32xf32, #tpu.memory_space<vmem>>, %arg2: memref<32x128xbf16, #tpu.memory_space<vmem>>, %arg3: memref<1x128xf32, #tpu.memory_space<vmem>>, %arg4: memref<128x16xbf16, #tpu.memory_space<vmem>>, %arg5: memref<1x16xf32, #tpu.memory_space<vmem>>, %arg6: memref<8x16xf32, #tpu.memory_space<vmem>>) attributes {dimension_semantics = [#tpu.dimension_semantics<parallel>], iteration_bounds = array<i64: 1>, scalar_prefetch = 0 : i64, scratch_operands = 0 : i64, tpu.core_type = #tpu.core_type<tc>, window_params = [{transform_indices = @transform_0, window_bounds = array<i64: 8, 32>}, {pipeline_mode = #tpu.pipeline_mode<synchronous>, transform_indices = @transform_1, window_bounds = array<i64: 32, 128>}, {pipeline_mode = #tpu.pipeline_mode<synchronous>, transform_indices = @transform_2, window_bounds = array<i64: 1, 128>}, {pipeline_mode = #tpu.pipeline_mode<synchronous>, transform_indices = @transform_3, window_bounds = array<i64: 128, 16>}, {pipeline_mode = #tpu.pipeline_mode<synchronous>, transform_indices = @transform_4, window_bounds = array<i64: 1, 16>}, {transform_indices = @transform_5, window_bounds = array<i64: 8, 16>}]} {
    %c0 = arith.constant 0 : index
    %c0_0 = arith.constant 0 : index
    %0 = vector.load %arg1[%c0, %c0_0] : memref<8x32xf32, #tpu.memory_space<vmem>>, vector<8x32xf32>
    %1 = arith.truncf %0 : vector<8x32xf32> to vector<8x32xbf16>
    %c0_1 = arith.constant 0 : index
    %c0_2 = arith.constant 0 : index
    %2 = vector.load %arg2[%c0_1, %c0_2] : memref<32x128xbf16, #tpu.memory_space<vmem>>, vector<32x128xbf16>
    %cst = arith.constant dense<0.000000e+00> : vector<8x128xf32>
    %3 = tpu.matmul %1, %2, %cst {dimension_numbers = #tpu.dot_dimension_numbers<[1], [0], [0], [1], [0, 0, 1, 1], [], []>} : vector<8x32xbf16>, vector<32x128xbf16>, vector<8x128xf32> -> vector<8x128xf32>
    %c0_3 = arith.constant 0 : index
    %c0_4 = arith.constant 0 : index
    %4 = vector.load %arg3[%c0_3, %c0_4] : memref<1x128xf32, #tpu.memory_space<vmem>>, vector<1x128xf32>
    %5 = vector.broadcast %4 : vector<1x128xf32> to vector<8x128xf32>
    %6 = arith.addf %3, %5 : vector<8x128xf32>
    %7 = math.tanh %6 : vector<8x128xf32>
    %8 = arith.truncf %7 : vector<8x128xf32> to vector<8x128xbf16>
    %c0_5 = arith.constant 0 : index
    %c0_6 = arith.constant 0 : index
    %9 = vector.load %arg4[%c0_5, %c0_6] : memref<128x16xbf16, #tpu.memory_space<vmem>>, vector<128x16xbf16>
    %cst_7 = arith.constant dense<0.000000e+00> : vector<8x16xf32>
    %10 = tpu.matmul %8, %9, %cst_7 {dimension_numbers = #tpu.dot_dimension_numbers<[1], [0], [0], [1], [0, 0, 1, 1], [], []>} : vector<8x128xbf16>, vector<128x16xbf16>, vector<8x16xf32> -> vector<8x16xf32>
    %c0_8 = arith.constant 0 : index
    %c0_9 = arith.constant 0 : index
    %11 = vector.load %arg5[%c0_8, %c0_9] : memref<1x16xf32, #tpu.memory_space<vmem>>, vector<1x16xf32>
    %12 = vector.broadcast %11 : vector<1x16xf32> to vector<8x16xf32>
    %13 = arith.addf %10, %12 : vector<8x16xf32>
    %14 = math.tanh %13 : vector<8x16xf32>
    %c0_10 = arith.constant 0 : index
    %c0_11 = arith.constant 0 : index
    %15 = vector.load %arg6[%c0_10, %c0_11] : memref<8x16xf32, #tpu.memory_space<vmem>>, vector<8x16xf32>
    tpu.vector_store %arg6[%c0_10, %c0_11], %14 {strides = array<i32>} : memref<8x16xf32, #tpu.memory_space<vmem>>, vector<8x16xf32>,
    return
  }
  func.func @transform_0(%arg0: i32) -> (i32, i32) {
    %c0_i32 = arith.constant 0 : i32
    %c0_i32_0 = arith.constant 0 : i32
    return %arg0, %c0_i32 : i32, i32
  }
  func.func @transform_1(%arg0: i32) -> (i32, i32) {
    %c0_i32 = arith.constant 0 : i32
    %c0_i32_0 = arith.constant 0 : i32
    %c0_i32_1 = arith.constant 0 : i32
    return %c0_i32, %c0_i32_0 : i32, i32
  }
  func.func @transform_2(%arg0: i32) -> (i32, i32) {
    %c0_i32 = arith.constant 0 : i32
    %c0_i32_0 = arith.constant 0 : i32
    %c0_i32_1 = arith.constant 0 : i32
    return %c0_i32, %c0_i32_0 : i32, i32
  }
  func.func @transform_3(%arg0: i32) -> (i32, i32) {
    %c0_i32 = arith.constant 0 : i32
    %c0_i32_0 = arith.constant 0 : i32
    %c0_i32_1 = arith.constant 0 : i32
    return %c0_i32, %c0_i32_0 : i32, i32
  }
  func.func @transform_4(%arg0: i32) -> (i32, i32) {
    %c0_i32 = arith.constant 0 : i32
    %c0_i32_0 = arith.constant 0 : i32
    %c0_i32_1 = arith.constant 0 : i32
    return %c0_i32, %c0_i32_0 : i32, i32
  }
  func.func @transform_5(%arg0: i32) -> (i32, i32) {
    %c0_i32 = arith.constant 0 : i32
    %c0_i32_0 = arith.constant 0 : i32
    return %arg0, %c0_i32 : i32, i32
  }
}

module attributes {stable_mosaic.version = 11 : i64} {
  func.func @_obfuscator_mlp_kernel(%arg0: i32, %arg1: memref<8x32xf32, #tpu.memory_space<vmem>>, %arg2: memref<32x128xbf16, #tpu.memory_space<vmem>>, %arg3: memref<1x128xf32, #tpu.memory_space<vmem>>, %arg4: memref<128x16xbf16, #tpu.memory_space<vmem>>, %arg5: memref<1x16xf32, #tpu.memory_space<vmem>>, %arg6: memref<8x16xf32, #tpu.memory_space<vmem>>) attributes {dimension_semantics = [#tpu.dimension_semantics<parallel>], iteration_bounds = array<i64: 1>, scalar_prefetch = 0 : i64, scratch_operands = 0 : i64, tpu.core_type = #tpu.core_type<tc>, window_params = [{transform_indices = @transform_0, window_bounds = array<i64: 8, 32>}, {pipeline_mode = #tpu.pipeline_mode<synchronous>, transform_indices = @transform_1, window_bounds = array<i64: 32, 128>}, {pipeline_mode = #tpu.pipeline_mode<synchronous>, transform_indices = @transform_2, window_bounds = array<i64: 1, 128>}, {pipeline_mode = #tpu.pipeline_mode<synchronous>, transform_indices = @transform_3, window_bounds = array<i64: 128, 16>}, {pipeline_mode = #tpu.pipeline_mode<synchronous>, transform_indices = @transform_4, window_bounds = array<i64: 1, 16>}, {transform_indices = @transform_5, window_bounds = array<i64: 8, 16>}]} {
    %c0 = arith.constant 0 : index
    %c0_0 = arith.constant 0 : index
    %0 = vector.load %arg1[%c0, %c0_0] : memref<8x32xf32, #tpu.memory_space<vmem>>, vector<8x32xf32>
    %1 = arith.truncf %0 : vector<8x32xf32> to vector<8x32xbf16>
    %c0_1 = arith.constant 0 : index
    %c0_2 = arith.constant 0 : index
    %2 = vector.load %arg2[%c0_1, %c0_2] : memref<32x128xbf16, #tpu.memory_space<vmem>>, vector<32x128xbf16>
    %cst = arith.constant dense<0.000000e+00> : vector<8x128xf32>
    %3 = tpu.matmul %1, %2, %cst {dimension_numbers = #tpu.dot_dimension_numbers<[1], [0], [0], [1], [0, 0, 1, 1], [], []>} : vector<8x32xbf16>, vector<32x128xbf16>, vector<8x128xf32> -> vector<8x128xf32>
    %c0_3 = arith.constant 0 : index
    %c0_4 = arith.constant 0 : index
    %4 = vector.load %arg3[%c0_3, %c0_4] : memref<1x128xf32, #tpu.memory_space<vmem>>, vector<1x128xf32>
    %5 = vector.broadcast %4 : vector<1x128xf32> to vector<8x128xf32>
    %6 = arith.addf %3, %5 : vector<8x128xf32>
    %7 = math.tanh %6 : vector<8x128xf32>
    %8 = arith.truncf %7 : vector<8x128xf32> to vector<8x128xbf16>
    %c0_5 = arith.constant 0 : index
    %c0_6 = arith.constant 0 : index
    %9 = vector.load %arg4[%c0_5, %c0_6] : memref<128x16xbf16, #tpu.memory_space<vmem>>, vector<128x16xbf16>
    %cst_7 = arith.constant dense<0.000000e+00> : vector<8x16xf32>
    %10 = tpu.matmul %8, %9, %cst_7 {dimension_numbers = #tpu.dot_dimension_numbers<[1], [0], [0], [1], [0, 0, 1, 1], [], []>} : vector<8x128xbf16>, vector<128x16xbf16>, vector<8x16xf32> -> vector<8x16xf32>
    %c0_8 = arith.constant 0 : index
    %c0_9 = arith.constant 0 : index
    %11 = vector.load %arg5[%c0_8, %c0_9] : memref<1x16xf32, #tpu.memory_space<vmem>>, vector<1x16xf32>
    %12 = vector.broadcast %11 : vector<1x16xf32> to vector<8x16xf32>
    %13 = arith.addf %10, %12 : vector<8x16xf32>
    %14 = math.tanh %13 : vector<8x16xf32>
    %c0_10 = arith.constant 0 : index
    %c0_11 = arith.constant 0 : index
    %15 = vector.load %arg6[%c0_10, %c0_11] : memref<8x16xf32, #tpu.memory_space<vmem>>, vector<8x16xf32>
    tpu.vector_store %arg6[%c0_10, %c0_11], %14 {strides = array<i32>} : memref<8x16xf32, #tpu.memory_space<vmem>>, vector<8x16xf32>,
    return
  }
  func.func @transform_0(%arg0: i32) -> (i32, i32) {
    %c0_i32 = arith.constant 0 : i32
    %c0_i32_0 = arith.constant 0 : i32
    return %arg0, %c0_i32 : i32, i32
  }
  func.func @transform_1(%arg0: i32) -> (i32, i32) {
    %c0_i32 = arith.constant 0 : i32
    %c0_i32_0 = arith.constant 0 : i32
    %c0_i32_1 = arith.constant 0 : i32
    return %c0_i32, %c0_i32_0 : i32, i32
  }
  func.func @transform_2(%arg0: i32) -> (i32, i32) {
    %c0_i32 = arith.constant 0 : i32
    %c0_i32_0 = arith.constant 0 : i32
    %c0_i32_1 = arith.constant 0 : i32
    return %c0_i32, %c0_i32_0 : i32, i32
  }
  func.func @transform_3(%arg0: i32) -> (i32, i32) {
    %c0_i32 = arith.constant 0 : i32
    %c0_i32_0 = arith.constant 0 : i32
    %c0_i32_1 = arith.constant 0 : i32
    return %c0_i32, %c0_i32_0 : i32, i32
  }
  func.func @transform_4(%arg0: i32) -> (i32, i32) {
    %c0_i32 = arith.constant 0 : i32
    %c0_i32_0 = arith.constant 0 : i32
    %c0_i32_1 = arith.constant 0 : i32
    return %c0_i32, %c0_i32_0 : i32, i32
  }
  func.func @transform_5(%arg0: i32) -> (i32, i32) {
    %c0_i32 = arith.constant 0 : i32
    %c0_i32_0 = arith.constant 0 : i32
    return %arg0, %c0_i32 : i32, i32
  }
}

</mosaic_0001>

<llo_original>
// kernel: tpu_custom_call.1
$region0: #{tpu_custom_call.1}
  #allocation0 [shape = 'u32[]', space=smem, size = 0x4, offset = 0x4, fixed_abs, tag = 'smem constant byte address 0x4 - core index']
  #allocation1 [shape = 'u32[144,128]{1,0:T(1,128)}', space=vmem, size = 0x12000, scoped, tag = 'internal scratch']
  %s0 = inlined_call_operand.vmem [shape: f32[8,32], index: 0, kind: input, shape index: {}]
  %s1 = inlined_call_operand.vmem [shape: bf16[32,128], index: 1, kind: input, shape index: {}]
  %s2 = inlined_call_operand.vmem [shape: f32[1,128], index: 2, kind: input, shape index: {}]
  %s3 = inlined_call_operand.vmem [shape: bf16[128,16], index: 3, kind: input, shape index: {}]
  %s4 = inlined_call_operand.vmem [shape: f32[1,16], index: 4, kind: input, shape index: {}]
  %s5 = inlined_call_operand.hbm [shape: f32[8,16], index: 5, kind: output, shape index: {}]
  %s6 = sld [smem:[#allocation0]]
  $region30: #{tpu_custom_call.1} parent=0
    _
  %s8 = ssub.s32 1, %s6
  %s9 = scalar_select 0, %s8, %s6
  $region1: #{tpu_custom_call.1} parent=0
    #allocation2 [shape = 'u8[4096]{0}', space=vmem, size = 0x1000, scoped, tag = 'output window, operand 0, single buffered']
    #allocation3 [shape = 's32[1]{0}', space=sflag, size = 0x4, scoped, tag = 'scoped memory for tpu_custom_call.1']
    %10 = vsyncpa [#allocation3], 0
    // Predicated region
    $region2: #{tpu_custom_call.1} parent=1 // pred_check
      _
    $region3: #{tpu_custom_call.1} parent=1 // pred_check_branch
      %12 = sbr.rel (0) target = $region5
    $region4: #{tpu_custom_call.1} parent=1 // pred_region
      _
    $region5: #{tpu_custom_call.1} parent=1 // pred_fallthru
      _
    // Predicated region
    $region6: #{tpu_custom_call.1} parent=1 // pred_check
      _
    $region7: #{tpu_custom_call.1} parent=1 // pred_check_branch
      %14 = sbr.rel (0) target = $region9
    $region8: #{tpu_custom_call.1} parent=1 // pred_region
      _
    $region9: #{tpu_custom_call.1} parent=1 // pred_fallthru
      _
    // Predicated region
    $region10: #{tpu_custom_call.1} parent=1 // pred_check
      _
    $region11: #{tpu_custom_call.1} parent=1 // pred_check_branch
      %16 = sbr.rel (0) target = $region13
    $region12: #{tpu_custom_call.1} parent=1 // pred_region
      _
    $region13: #{tpu_custom_call.1} parent=1 // pred_fallthru
      _
    // Predicated region
    $region14: #{tpu_custom_call.1} parent=1 // pred_check
      _
    $region15: #{tpu_custom_call.1} parent=1 // pred_check_branch
      %18 = sbr.rel (0) target = $region17
    $region16: #{tpu_custom_call.1} parent=1 // pred_region
      _
    $region17: #{tpu_custom_call.1} parent=1 // pred_fallthru
      _
    // Predicated region
    $region18: #{tpu_custom_call.1} parent=1 // pred_check
      _
    $region19: #{tpu_custom_call.1} parent=1 // pred_check_branch
      %20 = sbr.rel (0) target = $region21
    $region20: #{tpu_custom_call.1} parent=1 // pred_region
      _
    $region21: #{tpu_custom_call.1} parent=1 // pred_fallthru
      _
    %v22 = vld [vmem:[%s0] sm:$0xff]
    %v23 = vpack.c.bf16 %v22, %v22
    %v24 = vld [vmem:[%s1] sm:$0xf]
    %v25 = vld [vmem:[%s1 + $0x4] sm:$0xf]
    %v26 = vld [vmem:[%s1 + $0x8] sm:$0xf]
    %v27 = vld [vmem:[%s1 + $0xc] sm:$0xf]
    %v28 = vld [vmem:[%s2] sm:$0x1]
    %v30 = vlaneseq
    %v31 = vshrl.u32 %v30, 7
    %v32 = vsub.s32 0, %v31
    %v33 = vrot.slane %v28, %v32
    %v39 = vunpack.c.l.b16 %v24
    %v40 = vunpack.c.l.b16 %v25
    %v41 = vunpack.c.l.b16 %v26
    %v42 = vunpack.c.l.b16 %v27
    %v43 = vpack.c.b16 %v40, %v39
    %v44 = vpack.c.b16 %v42, %v41
    %vm47 = vcmask 261120
    %v49 = vsel %vm47, %v23, 0
    %51 = vmatprep.subr.bf16.mxu0 0
    %52 = vmatpush1.bf16.msra.mxu0 %v43
    %53 = vmatprep.subr.bf16.mxu0 0
    %54 = vmatpush1.bf16.msra.mxu0 %v44
    %55 = vmatprep.subr.bf16.mxu0 0
    %56 = vmatpush1.bf16.msra.mxu0 0
    %57 = vmatprep.subr.bf16.mxu0 0
    %58 = vmatpush1.bf16.msra.mxu0 0
    %59 = vmatprep.subr.bf16.mxu0 0
    %60 = vmatpush1.bf16.msra.mxu0 0
    %61 = vmatprep.subr.bf16.mxu0 0
    %62 = vmatpush1.bf16.msra.mxu0 0
    %63 = vmatprep.subr.bf16.mxu0 0
    %64 = vmatpush1.bf16.msra.mxu0 0
    %65 = vmatprep.subr.bf16.mxu0 0
    %66 = vmatpush1.bf16.msra.mxu0 0
    %67 = vmatprep.subr.bf16.mxu0 0
    %68 = vmatpush1.bf16.msra.mxu0 0
    %69 = vmatprep.subr.bf16.mxu0 0
    %70 = vmatpush1.bf16.msra.mxu0 0
    %71 = vmatprep.subr.bf16.mxu0 0
    %72 = vmatpush1.bf16.msra.mxu0 0
    %73 = vmatprep.subr.bf16.mxu0 0
    %74 = vmatpush1.bf16.msra.mxu0 0
    %75 = vmatprep.subr.bf16.mxu0 0
    %76 = vmatpush1.bf16.msra.mxu0 0
    %77 = vmatprep.subr.bf16.mxu0 0
    %78 = vmatpush1.bf16.msra.mxu0 0
    %79 = vmatprep.subr.bf16.mxu0 0
    %80 = vmatpush1.bf16.msra.mxu0 0
    %81 = vmatprep.subr.bf16.mxu0 0
    %82 = vmatpush1.bf16.msra.mxu0 0
    %83 = vmatprep.mubr.bf16.mxu0 0
    %84 = vmatmul.mubr.bf16.gmra.mrb[0].mxu0 %v49
    %v85 = vpop.f32.mrb[0].mxu0
    %v86 = vadd.f32 %v33, %v85
    %v87 = vpop.f32.mrb[0].mxu0
    %v88 = vpop.f32.mrb[0].mxu0
    %v89 = vpop.f32.mrb[0].mxu0
    %90 = vdwg.mxu0
    %v91 = vtanh.pop %v86
    %v92 = vpack.c.bf16 %v91, %v91
    %v93 = vld [vmem:[%s3] sm:$0xf]
    %v94 = vld [vmem:[%s3 + $0x4] sm:$0xf]
    %v95 = vld [vmem:[%s3 + $0x8] sm:$0xf]
    %v96 = vld [vmem:[%s3 + $0xc] sm:$0xf]
    %v97 = vld [vmem:[%s3 + $0x10] sm:$0xf]
    %v98 = vld [vmem:[%s3 + $0x14] sm:$0xf]
    %v99 = vld [vmem:[%s3 + $0x18] sm:$0xf]
    %v100 = vld [vmem:[%s3 + $0x1c] sm:$0xf]
    %v101 = vld [vmem:[%s3 + $0x20] sm:$0xf]
    %v102 = vld [vmem:[%s3 + $0x24] sm:$0xf]
    %v103 = vld [vmem:[%s3 + $0x28] sm:$0xf]
    %v104 = vld [vmem:[%s3 + $0x2c] sm:$0xf]
    %v105 = vld [vmem:[%s3 + $0x30] sm:$0xf]
    %v106 = vld [vmem:[%s3 + $0x34] sm:$0xf]
    %v107 = vld [vmem:[%s3 + $0x38] sm:$0xf]
    %v108 = vld [vmem:[%s3 + $0x3c] sm:$0xf]
    %v109 = vld [vmem:[%s4] sm:$0x1]
    %v111 = vlaneseq
    %v112 = vshrl.u32 %v111, 7
    %v113 = vsub.s32 0, %v112
    %v114 = vrot.slane %v109, %v113
    %v132 = vunpack.c.l.b16 %v93
    %v133 = vunpack.c.l.b16 %v94
    %v134 = vunpack.c.l.b16 %v95
    %v135 = vunpack.c.l.b16 %v96
    %v136 = vunpack.c.l.b16 %v97
    %v137 = vunpack.c.l.b16 %v98
    %v138 = vunpack.c.l.b16 %v99
    %v139 = vunpack.c.l.b16 %v100
    %v140 = vunpack.c.l.b16 %v101
    %v141 = vunpack.c.l.b16 %v102
    %v142 = vunpack.c.l.b16 %v103
    %v143 = vunpack.c.l.b16 %v104
    %v144 = vunpack.c.l.b16 %v105
    %v145 = vunpack.c.l.b16 %v106
    %v146 = vunpack.c.l.b16 %v107
    %v147 = vunpack.c.l.b16 %v108
    %v148 = vpack.c.b16 %v133, %v132
    %v149 = vpack.c.b16 %v135, %v134
    %v150 = vpack.c.b16 %v137, %v136
    %v151 = vpack.c.b16 %v139, %v138
    %v152 = vpack.c.b16 %v141, %v140
    %v153 = vpack.c.b16 %v143, %v142
    %v154 = vpack.c.b16 %v145, %v144
    %v155 = vpack.c.b16 %v147, %v146
    %164 = vmatprep.subr.bf16.mxu0 0
    %165 = vmatpush1.bf16.msra.mxu0 %v148
    %166 = vmatprep.subr.bf16.mxu0 0
    %167 = vmatpush1.bf16.msra.mxu0 %v149
    %168 = vmatprep.subr.bf16.mxu0 0
    %169 = vmatpush1.bf16.msra.mxu0 %v150
    %170 = vmatprep.subr.bf16.mxu0 0
    %171 = vmatpush1.bf16.msra.mxu0 %v151
    %172 = vmatprep.subr.bf16.mxu0 0
    %173 = vmatpush1.bf16.msra.mxu0 %v152
    %174 = vmatprep.subr.bf16.mxu0 0
    %175 = vmatpush1.bf16.msra.mxu0 %v153
    %176 = vmatprep.subr.bf16.mxu0 0
    %177 = vmatpush1.bf16.msra.mxu0 %v154
    %178 = vmatprep.subr.bf16.mxu0 0
    %179 = vmatpush1.bf16.msra.mxu0 %v155
    %180 = vmatprep.subr.bf16.mxu0 0
    %181 = vmatpush1.bf16.msra.mxu0 0
    %182 = vmatprep.subr.bf16.mxu0 0
    %183 = vmatpush1.bf16.msra.mxu0 0
    %184 = vmatprep.subr.bf16.mxu0 0
    %185 = vmatpush1.bf16.msra.mxu0 0
    %186 = vmatprep.subr.bf16.mxu0 0
    %187 = vmatpush1.bf16.msra.mxu0 0
    %188 = vmatprep.subr.bf16.mxu0 0
    %189 = vmatpush1.bf16.msra.mxu0 0
    %190 = vmatprep.subr.bf16.mxu0 0
    %191 = vmatpush1.bf16.msra.mxu0 0
    %192 = vmatprep.subr.bf16.mxu0 0
    %193 = vmatpush1.bf16.msra.mxu0 0
    %194 = vmatprep.subr.bf16.mxu0 0
    %195 = vmatpush1.bf16.msra.mxu0 0
    %196 = vmatprep.mubr.bf16.mxu0 0
    %197 = vmatmul.mubr.bf16.gmra.mrb[0].mxu0 %v92
    %v198 = vpop.f32.mrb[0].mxu0
    %v199 = vadd.f32 %v114, %v198
    %v200 = vpop.f32.mrb[0].mxu0
    %v201 = vpop.f32.mrb[0].mxu0
    %v202 = vpop.f32.mrb[0].mxu0
    %203 = vdwg.mxu0
    %v204 = vtanh.pop %v199
    %vm205 = vcmask 130048
    %206 = vst.msk [vmem:[#allocation2] sm:$0xff] %vm205, %v204
    // Predicated region
    $region22: #{tpu_custom_call.1} parent=1 // pred_check
      _
    $region23: #{tpu_custom_call.1} parent=1 // pred_check_branch
      %208 = sbr.rel (0) target = $region25
    $region24: #{tpu_custom_call.1} parent=1 // pred_region
      %s210 = ssub.s32 128, 128
      %211 = vsyncadd [#allocation3], %s210
      %s213 = sshll.u32 [#allocation2], 4
      %s214 = int_to_ptr.vmem [resolvable:$true] %s213
      %216 = dma.vmem_to_hbm [thread:$0]  %s214, 128, %s5, [#allocation3]
    $region25: #{tpu_custom_call.1} parent=1 // pred_fallthru
      _
    // Predicated region
    $region26: #{tpu_custom_call.1} parent=1 // pred_check
      _
    $region27: #{tpu_custom_call.1} parent=1 // pred_check_branch
      %218 = sbr.rel (0) target = $region29
    $region28: #{tpu_custom_call.1} parent=1 // pred_region
      %219 = dma.done [#allocation3], 128
    $region29: #{tpu_custom_call.1} parent=1 // pred_fallthru
      _
    %220 = vsyncpa [#allocation3], 1

// kernel: tpu_custom_call.1
$region0: #{tpu_custom_call.1}
  #allocation0 [shape = 'u32[]', space=smem, size = 0x4, offset = 0x4, fixed_abs, tag = 'smem constant byte address 0x4 - core index']
  #allocation1 [shape = 'u32[144,128]{1,0:T(1,128)}', space=vmem, size = 0x12000, scoped, tag = 'internal scratch']
  %s0 = inlined_call_operand.vmem [shape: f32[8,32], index: 0, kind: input, shape index: {}]
  %s1 = inlined_call_operand.vmem [shape: bf16[32,128], index: 1, kind: input, shape index: {}]
  %s2 = inlined_call_operand.vmem [shape: f32[1,128], index: 2, kind: input, shape index: {}]
  %s3 = inlined_call_operand.vmem [shape: bf16[128,16], index: 3, kind: input, shape index: {}]
  %s4 = inlined_call_operand.vmem [shape: f32[1,16], index: 4, kind: input, shape index: {}]
  %s5 = inlined_call_operand.hbm [shape: f32[8,16], index: 5, kind: output, shape index: {}]
  %s6 = sld [smem:[#allocation0]]
  $region30: #{tpu_custom_call.1} parent=0
    _
  %s8 = ssub.s32 1, %s6
  %s9 = scalar_select 0, %s8, %s6
  $region1: #{tpu_custom_call.1} parent=0
    #allocation2 [shape = 'u8[4096]{0}', space=vmem, size = 0x1000, scoped, tag = 'output window, operand 0, single buffered']
    #allocation3 [shape = 's32[1]{0}', space=sflag, size = 0x4, scoped, tag = 'scoped memory for tpu_custom_call.1']
    %10 = vsyncpa [#allocation3], 0
    // Predicated region
    $region2: #{tpu_custom_call.1} parent=1 // pred_check
      _
    $region3: #{tpu_custom_call.1} parent=1 // pred_check_branch
      %12 = sbr.rel (0) target = $region5
    $region4: #{tpu_custom_call.1} parent=1 // pred_region
      _
    $region5: #{tpu_custom_call.1} parent=1 // pred_fallthru
      _
    // Predicated region
    $region6: #{tpu_custom_call.1} parent=1 // pred_check
      _
    $region7: #{tpu_custom_call.1} parent=1 // pred_check_branch
      %14 = sbr.rel (0) target = $region9
    $region8: #{tpu_custom_call.1} parent=1 // pred_region
      _
    $region9: #{tpu_custom_call.1} parent=1 // pred_fallthru
      _
    // Predicated region
    $region10: #{tpu_custom_call.1} parent=1 // pred_check
      _
    $region11: #{tpu_custom_call.1} parent=1 // pred_check_branch
      %16 = sbr.rel (0) target = $region13
    $region12: #{tpu_custom_call.1} parent=1 // pred_region
      _
    $region13: #{tpu_custom_call.1} parent=1 // pred_fallthru
      _
    // Predicated region
    $region14: #{tpu_custom_call.1} parent=1 // pred_check
      _
    $region15: #{tpu_custom_call.1} parent=1 // pred_check_branch
      %18 = sbr.rel (0) target = $region17
    $region16: #{tpu_custom_call.1} parent=1 // pred_region
      _
    $region17: #{tpu_custom_call.1} parent=1 // pred_fallthru
      _
    // Predicated region
    $region18: #{tpu_custom_call.1} parent=1 // pred_check
      _
    $region19: #{tpu_custom_call.1} parent=1 // pred_check_branch
      %20 = sbr.rel (0) target = $region21
    $region20: #{tpu_custom_call.1} parent=1 // pred_region
      _
    $region21: #{tpu_custom_call.1} parent=1 // pred_fallthru
      _
    %v22 = vld [vmem:[%s0] sm:$0xff]
    %v23 = vpack.c.bf16 %v22, %v22
    %v24 = vld [vmem:[%s1] sm:$0xf]
    %v25 = vld [vmem:[%s1 + $0x4] sm:$0xf]
    %v26 = vld [vmem:[%s1 + $0x8] sm:$0xf]
    %v27 = vld [vmem:[%s1 + $0xc] sm:$0xf]
    %v28 = vld [vmem:[%s2] sm:$0x1]
    %v30 = vlaneseq
    %v31 = vshrl.u32 %v30, 7
    %v32 = vsub.s32 0, %v31
    %v33 = vrot.slane %v28, %v32
    %v39 = vunpack.c.l.b16 %v24
    %v40 = vunpack.c.l.b16 %v25
    %v41 = vunpack.c.l.b16 %v26
    %v42 = vunpack.c.l.b16 %v27
    %v43 = vpack.c.b16 %v40, %v39
    %v44 = vpack.c.b16 %v42, %v41
    %vm47 = vcmask 261120
    %v49 = vsel %vm47, %v23, 0
    %51 = vmatprep.subr.bf16.mxu0 0
    %52 = vmatpush1.bf16.msra.mxu0 %v43
    %53 = vmatprep.subr.bf16.mxu0 0
    %54 = vmatpush1.bf16.msra.mxu0 %v44
    %55 = vmatprep.subr.bf16.mxu0 0
    %56 = vmatpush1.bf16.msra.mxu0 0
    %57 = vmatprep.subr.bf16.mxu0 0
    %58 = vmatpush1.bf16.msra.mxu0 0
    %59 = vmatprep.subr.bf16.mxu0 0
    %60 = vmatpush1.bf16.msra.mxu0 0
    %61 = vmatprep.subr.bf16.mxu0 0
    %62 = vmatpush1.bf16.msra.mxu0 0
    %63 = vmatprep.subr.bf16.mxu0 0
    %64 = vmatpush1.bf16.msra.mxu0 0
    %65 = vmatprep.subr.bf16.mxu0 0
    %66 = vmatpush1.bf16.msra.mxu0 0
    %67 = vmatprep.subr.bf16.mxu0 0
    %68 = vmatpush1.bf16.msra.mxu0 0
    %69 = vmatprep.subr.bf16.mxu0 0
    %70 = vmatpush1.bf16.msra.mxu0 0
    %71 = vmatprep.subr.bf16.mxu0 0
    %72 = vmatpush1.bf16.msra.mxu0 0
    %73 = vmatprep.subr.bf16.mxu0 0
    %74 = vmatpush1.bf16.msra.mxu0 0
    %75 = vmatprep.subr.bf16.mxu0 0
    %76 = vmatpush1.bf16.msra.mxu0 0
    %77 = vmatprep.subr.bf16.mxu0 0
    %78 = vmatpush1.bf16.msra.mxu0 0
    %79 = vmatprep.subr.bf16.mxu0 0
    %80 = vmatpush1.bf16.msra.mxu0 0
    %81 = vmatprep.subr.bf16.mxu0 0
    %82 = vmatpush1.bf16.msra.mxu0 0
    %83 = vmatprep.mubr.bf16.mxu0 0
    %84 = vmatmul.mubr.bf16.gmra.mrb[0].mxu0 %v49
    %v85 = vpop.f32.mrb[0].mxu0
    %v86 = vadd.f32 %v33, %v85
    %v87 = vpop.f32.mrb[0].mxu0
    %v88 = vpop.f32.mrb[0].mxu0
    %v89 = vpop.f32.mrb[0].mxu0
    %90 = vdwg.mxu0
    %v91 = vtanh.pop %v86
    %v92 = vpack.c.bf16 %v91, %v91
    %v93 = vld [vmem:[%s3] sm:$0xf]
    %v94 = vld [vmem:[%s3 + $0x4] sm:$0xf]
    %v95 = vld [vmem:[%s3 + $0x8] sm:$0xf]
    %v96 = vld [vmem:[%s3 + $0xc] sm:$0xf]
    %v97 = vld [vmem:[%s3 + $0x10] sm:$0xf]
    %v98 = vld [vmem:[%s3 + $0x14] sm:$0xf]
    %v99 = vld [vmem:[%s3 + $0x18] sm:$0xf]
    %v100 = vld [vmem:[%s3 + $0x1c] sm:$0xf]
    %v101 = vld [vmem:[%s3 + $0x20] sm:$0xf]
    %v102 = vld [vmem:[%s3 + $0x24] sm:$0xf]
    %v103 = vld [vmem:[%s3 + $0x28] sm:$0xf]
    %v104 = vld [vmem:[%s3 + $0x2c] sm:$0xf]
    %v105 = vld [vmem:[%s3 + $0x30] sm:$0xf]
    %v106 = vld [vmem:[%s3 + $0x34] sm:$0xf]
    %v107 = vld [vmem:[%s3 + $0x38] sm:$0xf]
    %v108 = vld [vmem:[%s3 + $0x3c] sm:$0xf]
    %v109 = vld [vmem:[%s4] sm:$0x1]
    %v111 = vlaneseq
    %v112 = vshrl.u32 %v111, 7
    %v113 = vsub.s32 0, %v112
    %v114 = vrot.slane %v109, %v113
    %v132 = vunpack.c.l.b16 %v93
    %v133 = vunpack.c.l.b16 %v94
    %v134 = vunpack.c.l.b16 %v95
    %v135 = vunpack.c.l.b16 %v96
    %v136 = vunpack.c.l.b16 %v97
    %v137 = vunpack.c.l.b16 %v98
    %v138 = vunpack.c.l.b16 %v99
    %v139 = vunpack.c.l.b16 %v100
    %v140 = vunpack.c.l.b16 %v101
    %v141 = vunpack.c.l.b16 %v102
    %v142 = vunpack.c.l.b16 %v103
    %v143 = vunpack.c.l.b16 %v104
    %v144 = vunpack.c.l.b16 %v105
    %v145 = vunpack.c.l.b16 %v106
    %v146 = vunpack.c.l.b16 %v107
    %v147 = vunpack.c.l.b16 %v108
    %v148 = vpack.c.b16 %v133, %v132
    %v149 = vpack.c.b16 %v135, %v134
    %v150 = vpack.c.b16 %v137, %v136
    %v151 = vpack.c.b16 %v139, %v138
    %v152 = vpack.c.b16 %v141, %v140
    %v153 = vpack.c.b16 %v143, %v142
    %v154 = vpack.c.b16 %v145, %v144
    %v155 = vpack.c.b16 %v147, %v146
    %164 = vmatprep.subr.bf16.mxu0 0
    %165 = vmatpush1.bf16.msra.mxu0 %v148
    %166 = vmatprep.subr.bf16.mxu0 0
    %167 = vmatpush1.bf16.msra.mxu0 %v149
    %168 = vmatprep.subr.bf16.mxu0 0
    %169 = vmatpush1.bf16.msra.mxu0 %v150
    %170 = vmatprep.subr.bf16.mxu0 0
    %171 = vmatpush1.bf16.msra.mxu0 %v151
    %172 = vmatprep.subr.bf16.mxu0 0
    %173 = vmatpush1.bf16.msra.mxu0 %v152
    %174 = vmatprep.subr.bf16.mxu0 0
    %175 = vmatpush1.bf16.msra.mxu0 %v153
    %176 = vmatprep.subr.bf16.mxu0 0
    %177 = vmatpush1.bf16.msra.mxu0 %v154
    %178 = vmatprep.subr.bf16.mxu0 0
    %179 = vmatpush1.bf16.msra.mxu0 %v155
    %180 = vmatprep.subr.bf16.mxu0 0
    %181 = vmatpush1.bf16.msra.mxu0 0
    %182 = vmatprep.subr.bf16.mxu0 0
    %183 = vmatpush1.bf16.msra.mxu0 0
    %184 = vmatprep.subr.bf16.mxu0 0
    %185 = vmatpush1.bf16.msra.mxu0 0
    %186 = vmatprep.subr.bf16.mxu0 0
    %187 = vmatpush1.bf16.msra.mxu0 0
    %188 = vmatprep.subr.bf16.mxu0 0
    %189 = vmatpush1.bf16.msra.mxu0 0
    %190 = vmatprep.subr.bf16.mxu0 0
    %191 = vmatpush1.bf16.msra.mxu0 0
    %192 = vmatprep.subr.bf16.mxu0 0
    %193 = vmatpush1.bf16.msra.mxu0 0
    %194 = vmatprep.subr.bf16.mxu0 0
    %195 = vmatpush1.bf16.msra.mxu0 0
    %196 = vmatprep.mubr.bf16.mxu0 0
    %197 = vmatmul.mubr.bf16.gmra.mrb[0].mxu0 %v92
    %v198 = vpop.f32.mrb[0].mxu0
    %v199 = vadd.f32 %v114, %v198
    %v200 = vpop.f32.mrb[0].mxu0
    %v201 = vpop.f32.mrb[0].mxu0
    %v202 = vpop.f32.mrb[0].mxu0
    %203 = vdwg.mxu0
    %v204 = vtanh.pop %v199
    %vm205 = vcmask 130048
    %206 = vst.msk [vmem:[#allocation2] sm:$0xff] %vm205, %v204
    // Predicated region
    $region22: #{tpu_custom_call.1} parent=1 // pred_check
      _
    $region23: #{tpu_custom_call.1} parent=1 // pred_check_branch
      %208 = sbr.rel (0) target = $region25
    $region24: #{tpu_custom_call.1} parent=1 // pred_region
      %s210 = ssub.s32 128, 128
      %211 = vsyncadd [#allocation3], %s210
      %s213 = sshll.u32 [#allocation2], 4
      %s214 = int_to_ptr.vmem [resolvable:$true] %s213
      %216 = dma.vmem_to_hbm [thread:$0]  %s214, 128, %s5, [#allocation3]
    $region25: #{tpu_custom_call.1} parent=1 // pred_fallthru
      _
    // Predicated region
    $region26: #{tpu_custom_call.1} parent=1 // pred_check
      _
    $region27: #{tpu_custom_call.1} parent=1 // pred_check_branch
      %218 = sbr.rel (0) target = $region29
    $region28: #{tpu_custom_call.1} parent=1 // pred_region
      %219 = dma.done [#allocation3], 128
    $region29: #{tpu_custom_call.1} parent=1 // pred_fallthru
      _
    %220 = vsyncpa [#allocation3], 1

</llo_original>
